<compile_context>
chip_gen: v5e
topology: v5e:2x2
jax: 0.10.0
libtpu: 0.0.40
codegen_flags: <defaults>
</compile_context>

<pallas_src>
import functools

import jax
import jax.numpy as jnp
from jax.experimental import pallas as pl
from jax.experimental.pallas import tpu as pltpu

LANES = 128
SUBLANES = 8
ACC_ROWS = 32                # accumulator = 4x (8,128) vregs -> 4 independent add chains
MAX_BLOCK_BYTES = 8 << 20    # per-operand per-block cap (16384 f32 rows / 32768 bf16 rows)


def _cdiv(a, b):
    return -(-a // b)


def _round_up(x, m):
    return _cdiv(x, m) * m


def _device_kind():
    try:
        return jax.devices()[0].device_kind.lower()
    except Exception:
        return ""


def _physical_vmem_bytes():
    try:
        info = pltpu.get_tpu_info()
        v = getattr(info, "vmem_capacity_bytes", None)
        if v:
            return int(v)
    except Exception:
        pass
    # Fallback: v7x-class chips have 64 MiB VMEM per TC, older gens 128 MiB.
    return (64 << 20) if "7" in _device_kind() else (128 << 20)


def _vmem_budget_bytes():
    # Budget for (num_operands x 2 pipeline buffers x block): leave headroom
    # below physical VMEM so double-buffering stays intact.
    return (40 << 20) if _physical_vmem_bytes() <= (64 << 20) else (64 << 20)


def _core_split_config():
    """(num TensorCore splits, dimension_semantics entry for the split axis)."""
    kind = _device_kind()
    if "7" in kind:                       # v7x: 2 TCs/chip; real split needs CORE_PARALLEL
        return 2, pltpu.CORE_PARALLEL
    if "v4" in kind or "v5p" in kind:     # megacore chips: "parallel" shards across TCs
        return 2, "parallel"
    return 1, "arbitrary"                 # v5e / v6e: single TensorCore


def _cast_before_sub(dtype):
    # bf16 VALU exists on v6e/v7x: do |a-b| natively in bf16 there and upcast
    # only for the f32 reduction. Older chips (no bf16 VPU) upcast inputs first.
    if dtype == jnp.float32:
        return False
    if dtype == jnp.bfloat16:
        kind = _device_kind()
        return any(t in kind for t in ("v2", "v3", "v4", "v5"))
    return True


def _l1_partial_sum_kernel(*refs, row_block, valid_rows, n_blocks,
                           needs_mask, cast_before_sub, num_pairs):
    """Accumulate per-(sublane, lane) partial sums of sum_p |a_p - b_p|.

    out_ref is a (1, ACC_ROWS, LANES) f32 block, VMEM-resident across the
    inner ("arbitrary") grid axis; the single cross-lane reduce + mean divide
    happen once in XLA glue.
    """
    out_ref = refs[-1]
    in_refs = refs[:-1]
    i = pl.program_id(1)

    @pl.when(i == 0)
    def _():
        out_ref[...] = jnp.zeros_like(out_ref)

    def absdiff():
        total = None
        for p in range(num_pairs):
            a = in_refs[2 * p][...]
            b = in_refs[2 * p + 1][...]
            if cast_before_sub:
                d = jnp.abs(a.astype(jnp.float32) - b.astype(jnp.float32))
            else:
                # Native-dtype subtract/abs (bf16 VALU on v6e/v7x), one upcast
                # for the f32 reduce keeps accumulation accuracy.
                # TODO(synk): if a v7x bundle dump shows VALU binding, push the
                # upcast down to the per-step (8,128) partials (grouped bf16
                # pre-reduction) or offload the row reduce to the idle MXU.
                d = jnp.abs(a - b).astype(jnp.float32)
            total = d if total is None else total + d
        return total

    def accumulate(d):
        # (row_block,128) -> (row_block/32, 32, 128): the axis-0 reduce is 4
        # independent (8,128) vreg add chains that co-issue on the 4 VALU
        # slots and stay hidden under the streaming DMA.
        part = d.reshape(row_block // ACC_ROWS, ACC_ROWS, LANES).sum(axis=0)
        out_ref[...] += part[None, :, :]

    if not needs_mask:
        accumulate(absdiff())
    else:
        # Unclamped global block index (int32: only overflows beyond 2^31 rows
        # ~ 1 TB of f32, practically unreachable).
        blk = pl.program_id(0) * pl.num_programs(1) + i

        @pl.when(blk < n_blocks - 1)           # steady state: mask-free path
        def _():
            accumulate(absdiff())

        @pl.when(blk >= n_blocks - 1)          # ragged tail / clamped duplicate
        def _():
            d = absdiff()
            row0 = blk * row_block
            row_ids = row0 + jax.lax.broadcasted_iota(
                jnp.int32, (row_block, LANES), 0)
            # Keep the select (NOT a 0/1 multiply): masked rows hold
            # uninitialized VMEM that may contain NaN/Inf.
            accumulate(jnp.where(row_ids < valid_rows, d, 0.0))


def _l1_sum_pairs(pairs):
    """sum_p sum(|a_p - b_p|) over lane-dense (rows, 128) slabs, as f32 scalar."""
    rows = pairs[0][0].shape[0]
    if rows == 0:
        return jnp.float32(0.0)
    dtype = pairs[0][0].dtype
    itemsize = jnp.dtype(dtype).itemsize
    num_ops = 2 * len(pairs)

    n_cores, split_sem = _core_split_config()
    budget = _vmem_budget_bytes()
    max_rows_block = max(ACC_ROWS, MAX_BLOCK_BYTES // (LANES * itemsize))
    max_rows_vmem = max(ACC_ROWS, budget // (num_ops * 2 * LANES * itemsize))
    row_block = min(max_rows_block, max_rows_vmem,
                    _round_up(_cdiv(rows, n_cores), ACC_ROWS))
    row_block = max(ACC_ROWS, (row_block // ACC_ROWS) * ACC_ROWS)

    n_blocks = _cdiv(rows, row_block)
    splits = n_cores if (n_cores > 1 and n_blocks >= 2) else 1
    if splits == 1:
        split_sem = "arbitrary"
    blocks_per_split = _cdiv(n_blocks, splits)
    needs_mask = (rows % row_block != 0) or (splits * blocks_per_split != n_blocks)

    def in_map(c, i):
        blk = c * blocks_per_split + i
        # Clamp so duplicate trailing blocks re-read the last real block
        # (their contribution is masked to zero in the kernel) instead of
        # issuing a fully out-of-bounds block.
        return (jnp.minimum(blk, n_blocks - 1), 0)

    kernel = functools.partial(
        _l1_partial_sum_kernel,
        row_block=row_block,
        valid_rows=rows,
        n_blocks=n_blocks,
        needs_mask=needs_mask,
        cast_before_sub=_cast_before_sub(dtype),
        num_pairs=len(pairs),
    )

    block_bytes = row_block * LANES * itemsize
    vmem_limit = int(min(_physical_vmem_bytes() - (8 << 20),
                         max(num_ops * 2 * block_bytes + (4 << 20), 32 << 20)))

    operands = [x for pair in pairs for x in pair]
    partials = pl.pallas_call(
        kernel,
        out_shape=jax.ShapeDtypeStruct((splits, ACC_ROWS, LANES), jnp.float32),
        grid_spec=pltpu.PrefetchScalarGridSpec(
            num_scalar_prefetch=0,
            grid=(splits, blocks_per_split),
            in_specs=[pl.BlockSpec((row_block, LANES), in_map)
                      for _ in range(num_ops)],
            out_specs=pl.BlockSpec((1, ACC_ROWS, LANES), lambda c, i: (c, 0, 0)),
        ),
        compiler_params=pltpu.CompilerParams(
            dimension_semantics=(split_sem, "arbitrary"),
            vmem_limit_bytes=vmem_limit,
        ),
    )(*operands)

    # Single cheap cross-lane reduction, done once in XLA.
    return jnp.sum(partials)


def _flatten_lane_dense(x):
    flat = x.reshape(-1)
    n_main = (flat.shape[0] // LANES) * LANES
    main = flat[:n_main].reshape(n_main // LANES, LANES)
    tail = flat[n_main:]
    return main, tail


def _tail_abs_sum(ta, tb):
    if ta.size == 0:
        return jnp.float32(0.0)
    # <128 leftover elements: cheaper to reduce in plain jnp than to jnp.pad
    # (which would re-copy the whole flattened tensors through HBM).
    return jnp.sum(jnp.abs(ta.astype(jnp.float32) - tb.astype(jnp.float32)))


def _common_dtype(a, b):
    dt = jnp.promote_types(a.dtype, b.dtype)
    return a.astype(dt), b.astype(dt)


def identity_mapping_loss(input, generated_from_input, target, generated_from_target):
    """Pallas equivalent of IdentityMappingLoss.forward."""
    a, b = input, generated_from_input
    c, d = target, generated_from_target
    assert a.shape == b.shape and c.shape == d.shape, "L1 operands must match"
    a, b = _common_dtype(a, b)
    c, d = _common_dtype(c, d)

    n1, n2 = a.size, c.size
    a_m, a_t = _flatten_lane_dense(a)
    b_m, b_t = _flatten_lane_dense(b)
    c_m, c_t = _flatten_lane_dense(c)
    d_m, d_t = _flatten_lane_dense(d)

    if n1 == n2 and a.dtype == c.dtype:
        # Fused: one pallas_call streams all four operands; equal denominators
        # let both terms accumulate into a single VMEM accumulator.
        main = _l1_sum_pairs([(a_m, b_m), (c_m, d_m)])
        tails = _tail_abs_sum(a_t, b_t) + _tail_abs_sum(c_t, d_t)
        return (main + tails) / jnp.float32(n1)

    s1 = _l1_sum_pairs([(a_m, b_m)]) + _tail_abs_sum(a_t, b_t)
    s2 = _l1_sum_pairs([(c_m, d_m)]) + _tail_abs_sum(c_t, d_t)
    return s1 / jnp.float32(n1) + s2 / jnp.float32(n2)


if __name__ == "__main__":
    key = jax.random.PRNGKey(0)
    k1, k2, k3, k4 = jax.random.split(key, 4)

    # Main check: NCHW images, fused single-kernel path.
    shape = (2, 4, 16, 16)
    x = jax.random.normal(k1, shape, dtype=jnp.float32)
    gx = jax.random.normal(k2, shape, dtype=jnp.float32)
    y = jax.random.normal(k3, shape, dtype=jnp.float32)
    gy = jax.random.normal(k4, shape, dtype=jnp.float32)

    loss = identity_mapping_loss(x, gx, y, gy)
    jax.block_until_ready(loss)
    ref = jnp.mean(jnp.abs(x - gx)) + jnp.mean(jnp.abs(y - gy))
    assert jnp.allclose(loss, ref, rtol=1e-5, atol=1e-5), (loss, ref)

    # Ragged sizes (not multiples of 128) with mismatched pair sizes:
    # exercises the unfused path, the in-kernel edge mask and the jnp tail.
    xr = jax.random.normal(k1, (2, 3, 100), dtype=jnp.float32)
    gxr = jax.random.normal(k2, (2, 3, 100), dtype=jnp.float32)
    yr = jax.random.normal(k3, (3, 5, 7), dtype=jnp.float32)
    gyr = jax.random.normal(k4, (3, 5, 7), dtype=jnp.float32)
    loss_r = identity_mapping_loss(xr, gxr, yr, gyr)
    jax.block_until_ready(loss_r)
    ref_r = jnp.mean(jnp.abs(xr - gxr)) + jnp.mean(jnp.abs(yr - gyr))
    assert jnp.allclose(loss_r, ref_r, rtol=1e-5, atol=1e-5), (loss_r, ref_r)

    # bf16 smoke test (native bf16 subtract path on bf16-VPU chips).
    xb, gxb = x.astype(jnp.bfloat16), gx.astype(jnp.bfloat16)
    yb, gyb = y.astype(jnp.bfloat16), gy.astype(jnp.bfloat16)
    loss_b = identity_mapping_loss(xb, gxb, yb, gyb)
    jax.block_until_ready(loss_b)
    ref_b = (jnp.mean(jnp.abs(xb.astype(jnp.float32) - gxb.astype(jnp.float32)))
             + jnp.mean(jnp.abs(yb.astype(jnp.float32) - gyb.astype(jnp.float32))))
    assert jnp.allclose(loss_b, ref_b, rtol=2e-2, atol=2e-2), (loss_b, ref_b)

    print("KERNEL_OK")
</pallas_src>

<mosaic_0001>
module attributes {stable_mosaic.version = 11 : i64} {
  func.func @_l1_partial_sum_kernel(%arg0: i32, %arg1: i32, %arg2: memref<32x128xf32, #tpu.memory_space<vmem>>, %arg3: memref<32x128xf32, #tpu.memory_space<vmem>>, %arg4: memref<32x128xf32, #tpu.memory_space<vmem>>, %arg5: memref<32x128xf32, #tpu.memory_space<vmem>>, %arg6: memref<1x32x128xf32, #tpu.memory_space<vmem>>) attributes {dimension_semantics = [#tpu.dimension_semantics<arbitrary>, #tpu.dimension_semantics<arbitrary>], iteration_bounds = array<i64: 1, 1>, scalar_prefetch = 0 : i64, scratch_operands = 0 : i64, tpu.core_type = #tpu.core_type<tc>, window_params = [{transform_indices = @transform_0, window_bounds = array<i64: 32, 128>}, {transform_indices = @transform_1, window_bounds = array<i64: 32, 128>}, {transform_indices = @transform_2, window_bounds = array<i64: 32, 128>}, {transform_indices = @transform_3, window_bounds = array<i64: 32, 128>}, {transform_indices = @transform_4, window_bounds = array<i64: 1, 32, 128>}]} {
    %c0_i32 = arith.constant 0 : i32
    %0 = arith.cmpi eq, %arg1, %c0_i32 : i32
    %1 = arith.extui %0 : i1 to i32
    %c0_i32_0 = arith.constant 0 : i32
    %2 = arith.cmpi ne, %1, %c0_i32_0 : i32
    scf.if %2 {
      %cst = arith.constant 0.000000e+00 : f32
      %11 = vector.broadcast %cst : f32 to vector<1x32x128xf32>
      %c0 = arith.constant 0 : index
      %c0_5 = arith.constant 0 : index
      %c0_6 = arith.constant 0 : index
      %12 = vector.load %arg6[%c0, %c0_5, %c0_6] : memref<1x32x128xf32, #tpu.memory_space<vmem>>, vector<1x32x128xf32>
      tpu.vector_store %arg6[%c0, %c0_5, %c0_6], %11 {strides = array<i32>} : memref<1x32x128xf32, #tpu.memory_space<vmem>>, vector<1x32x128xf32>,
    } else {
    }
    %c1_i32 = arith.constant 1 : i32
    %3 = arith.muli %arg0, %c1_i32 : i32
    %4 = arith.addi %3, %arg1 : i32
    %c0_i32_1 = arith.constant 0 : i32
    %5 = arith.cmpi slt, %4, %c0_i32_1 : i32
    %6 = arith.extui %5 : i1 to i32
    %c0_i32_2 = arith.constant 0 : i32
    %7 = arith.cmpi ne, %6, %c0_i32_2 : i32
    scf.if %7 {
      %c0 = arith.constant 0 : index
      %c0_5 = arith.constant 0 : index
      %11 = vector.load %arg2[%c0, %c0_5] : memref<32x128xf32, #tpu.memory_space<vmem>>, vector<32x128xf32>
      %c0_6 = arith.constant 0 : index
      %c0_7 = arith.constant 0 : index
      %12 = vector.load %arg3[%c0_6, %c0_7] : memref<32x128xf32, #tpu.memory_space<vmem>>, vector<32x128xf32>
      %13 = arith.subf %11, %12 : vector<32x128xf32>
      %14 = math.absf %13 : vector<32x128xf32>
      %c0_8 = arith.constant 0 : index
      %c0_9 = arith.constant 0 : index
      %15 = vector.load %arg4[%c0_8, %c0_9] : memref<32x128xf32, #tpu.memory_space<vmem>>, vector<32x128xf32>
      %c0_10 = arith.constant 0 : index
      %c0_11 = arith.constant 0 : index
      %16 = vector.load %arg5[%c0_10, %c0_11] : memref<32x128xf32, #tpu.memory_space<vmem>>, vector<32x128xf32>
      %17 = arith.subf %15, %16 : vector<32x128xf32>
      %18 = math.absf %17 : vector<32x128xf32>
      %19 = arith.addf %14, %18 : vector<32x128xf32>
      %20 = vector.shape_cast %19 : vector<32x128xf32> to vector<1x32x128xf32>
      %cst = arith.constant dense<0.000000e+00> : vector<32x128xf32>
      %21 = vector.multi_reduction <add>, %20, %cst [0] : vector<1x32x128xf32> to vector<32x128xf32>
      %c0_12 = arith.constant 0 : index
      %c0_13 = arith.constant 0 : index
      %c0_14 = arith.constant 0 : index
      %22 = vector.load %arg6[%c0_12, %c0_13, %c0_14] : memref<1x32x128xf32, #tpu.memory_space<vmem>>, vector<1x32x128xf32>
      %23 = vector.shape_cast %21 : vector<32x128xf32> to vector<1x32x128xf32>
      %24 = arith.addf %22, %23 : vector<1x32x128xf32>
      %c0_15 = arith.constant 0 : index
      %c0_16 = arith.constant 0 : index
      %c0_17 = arith.constant 0 : index
      %25 = vector.load %arg6[%c0_15, %c0_16, %c0_17] : memref<1x32x128xf32, #tpu.memory_space<vmem>>, vector<1x32x128xf32>
      tpu.vector_store %arg6[%c0_15, %c0_16, %c0_17], %24 {strides = array<i32>} : memref<1x32x128xf32, #tpu.memory_space<vmem>>, vector<1x32x128xf32>,
    } else {
    }
    %c0_i32_3 = arith.constant 0 : i32
    %8 = arith.cmpi sge, %4, %c0_i32_3 : i32
    %9 = arith.extui %8 : i1 to i32
    %c0_i32_4 = arith.constant 0 : i32
    %10 = arith.cmpi ne, %9, %c0_i32_4 : i32
    scf.if %10 {
      %c0 = arith.constant 0 : index
      %c0_5 = arith.constant 0 : index
      %11 = vector.load %arg2[%c0, %c0_5] : memref<32x128xf32, #tpu.memory_space<vmem>>, vector<32x128xf32>
      %c0_6 = arith.constant 0 : index
      %c0_7 = arith.constant 0 : index
      %12 = vector.load %arg3[%c0_6, %c0_7] : memref<32x128xf32, #tpu.memory_space<vmem>>, vector<32x128xf32>
      %13 = arith.subf %11, %12 : vector<32x128xf32>
      %14 = math.absf %13 : vector<32x128xf32>
      %c0_8 = arith.constant 0 : index
      %c0_9 = arith.constant 0 : index
      %15 = vector.load %arg4[%c0_8, %c0_9] : memref<32x128xf32, #tpu.memory_space<vmem>>, vector<32x128xf32>
      %c0_10 = arith.constant 0 : index
      %c0_11 = arith.constant 0 : index
      %16 = vector.load %arg5[%c0_10, %c0_11] : memref<32x128xf32, #tpu.memory_space<vmem>>, vector<32x128xf32>
      %17 = arith.subf %15, %16 : vector<32x128xf32>
      %18 = math.absf %17 : vector<32x128xf32>
      %19 = arith.addf %14, %18 : vector<32x128xf32>
      %c32_i32 = arith.constant 32 : i32
      %20 = arith.muli %4, %c32_i32 : i32
      %21 = tpu.iota {dimensions = array<i32: 0>} : vector<32x128xi32>
      %22 = vector.broadcast %20 : i32 to vector<32x128xi32>
      %23 = arith.addi %22, %21 : vector<32x128xi32>
      %c16_i32 = arith.constant 16 : i32
      %24 = vector.broadcast %c16_i32 : i32 to vector<32x128xi32>
      %25 = arith.cmpi slt, %23, %24 : vector<32x128xi32>
      %cst = arith.constant 0.000000e+00 : f32
      %26 = vector.broadcast %cst : f32 to vector<32x128xf32>
      %27 = arith.select %25, %19, %26 : vector<32x128xi1>, vector<32x128xf32>
      %28 = vector.shape_cast %27 : vector<32x128xf32> to vector<1x32x128xf32>
      %cst_12 = arith.constant dense<0.000000e+00> : vector<32x128xf32>
      %29 = vector.multi_reduction <add>, %28, %cst_12 [0] : vector<1x32x128xf32> to vector<32x128xf32>
      %c0_13 = arith.constant 0 : index
      %c0_14 = arith.constant 0 : index
      %c0_15 = arith.constant 0 : index
      %30 = vector.load %arg6[%c0_13, %c0_14, %c0_15] : memref<1x32x128xf32, #tpu.memory_space<vmem>>, vector<1x32x128xf32>
      %31 = vector.shape_cast %29 : vector<32x128xf32> to vector<1x32x128xf32>
      %32 = arith.addf %30, %31 : vector<1x32x128xf32>
      %c0_16 = arith.constant 0 : index
      %c0_17 = arith.constant 0 : index
      %c0_18 = arith.constant 0 : index
      %33 = vector.load %arg6[%c0_16, %c0_17, %c0_18] : memref<1x32x128xf32, #tpu.memory_space<vmem>>, vector<1x32x128xf32>
      tpu.vector_store %arg6[%c0_16, %c0_17, %c0_18], %32 {strides = array<i32>} : memref<1x32x128xf32, #tpu.memory_space<vmem>>, vector<1x32x128xf32>,
    } else {
    }
    return
  }
  func.func @transform_0(%arg0: i32, %arg1: i32) -> (i32, i32) {
    %c1_i32 = arith.constant 1 : i32
    %0 = arith.muli %arg0, %c1_i32 : i32
    %1 = arith.addi %0, %arg1 : i32
    %c0_i32 = arith.constant 0 : i32
    %2 = arith.minsi %1, %c0_i32 : i32
    %c0_i32_0 = arith.constant 0 : i32
    %c0_i32_1 = arith.constant 0 : i32
    return %2, %c0_i32_0 : i32, i32
  }
  func.func @transform_1(%arg0: i32, %arg1: i32) -> (i32, i32) {
    %c1_i32 = arith.constant 1 : i32
    %0 = arith.muli %arg0, %c1_i32 : i32
    %1 = arith.addi %0, %arg1 : i32
    %c0_i32 = arith.constant 0 : i32
    %2 = arith.minsi %1, %c0_i32 : i32
    %c0_i32_0 = arith.constant 0 : i32
    %c0_i32_1 = arith.constant 0 : i32
    return %2, %c0_i32_0 : i32, i32
  }
  func.func @transform_2(%arg0: i32, %arg1: i32) -> (i32, i32) {
    %c1_i32 = arith.constant 1 : i32
    %0 = arith.muli %arg0, %c1_i32 : i32
    %1 = arith.addi %0, %arg1 : i32
    %c0_i32 = arith.constant 0 : i32
    %2 = arith.minsi %1, %c0_i32 : i32
    %c0_i32_0 = arith.constant 0 : i32
    %c0_i32_1 = arith.constant 0 : i32
    return %2, %c0_i32_0 : i32, i32
  }
  func.func @transform_3(%arg0: i32, %arg1: i32) -> (i32, i32) {
    %c1_i32 = arith.constant 1 : i32
    %0 = arith.muli %arg0, %c1_i32 : i32
    %1 = arith.addi %0, %arg1 : i32
    %c0_i32 = arith.constant 0 : i32
    %2 = arith.minsi %1, %c0_i32 : i32
    %c0_i32_0 = arith.constant 0 : i32
    %c0_i32_1 = arith.constant 0 : i32
    return %2, %c0_i32_0 : i32, i32
  }
  func.func @transform_4(%arg0: i32, %arg1: i32) -> (i32, i32, i32) {
    %c0_i32 = arith.constant 0 : i32
    %c0_i32_0 = arith.constant 0 : i32
    %c0_i32_1 = arith.constant 0 : i32
    return %arg0, %c0_i32, %c0_i32_0 : i32, i32, i32
  }
}

</mosaic_0001>

<llo_original>
// kernel: tpu_custom_call.1
$region0: #{tpu_custom_call.1}
  #allocation0 [shape = 'u32[]', space=smem, size = 0x4, offset = 0x4, fixed_abs, tag = 'smem constant byte address 0x4 - core index']
  #allocation1 [shape = 'u32[72,128]{1,0:T(1,128)}', space=vmem, size = 0x9000, scoped, tag = 'internal scratch']
  %s0 = inlined_call_operand.hbm [shape: f32[16,128], index: 0, kind: input, shape index: {}]
  %s1 = inlined_call_operand.hbm [shape: f32[16,128], index: 1, kind: input, shape index: {}]
  %s2 = inlined_call_operand.hbm [shape: f32[16,128], index: 2, kind: input, shape index: {}]
  %s3 = inlined_call_operand.hbm [shape: f32[16,128], index: 3, kind: input, shape index: {}]
  %s4 = inlined_call_operand.hbm [shape: f32[1,32,128], index: 4, kind: output, shape index: {}]
  %s5 = sld [smem:[#allocation0]]
  $region54: #{tpu_custom_call.1} parent=0
    _
  %s7 = ssub.s32 1, %s5
  %s8 = scalar_select 0, %s7, %s5
  $region1: #{tpu_custom_call.1} parent=0
    #allocation2 [shape = 'u8[16384]{0}', space=vmem, size = 0x4000, scoped, tag = 'input window, operand 0, single buffered']
    #allocation3 [shape = 's32[1]{0}', space=sflag, size = 0x4, scoped, tag = 'scoped memory for tpu_custom_call.1']
    #allocation4 [shape = 's32[1]{0}', space=sflag, size = 0x4, scoped, tag = 'scoped memory for tpu_custom_call.1']
    #allocation5 [shape = 'u8[16384]{0}', space=vmem, size = 0x4000, scoped, tag = 'input window, operand 1, single buffered']
    #allocation6 [shape = 's32[1]{0}', space=sflag, size = 0x4, scoped, tag = 'scoped memory for tpu_custom_call.1']
    #allocation7 [shape = 'u8[16384]{0}', space=vmem, size = 0x4000, scoped, tag = 'input window, operand 2, single buffered']
    #allocation8 [shape = 'u8[16384]{0}', space=vmem, size = 0x4000, scoped, tag = 'input window, operand 3, single buffered']
    #allocation9 [shape = 's32[1]{0}', space=sflag, size = 0x4, scoped, tag = 'scoped memory for tpu_custom_call.1']
    #allocation10 [shape = 'u8[16384]{0}', space=vmem, size = 0x4000, scoped, tag = 'output window, operand 0, single buffered']
    %9 = vsyncpa [#allocation3], 0
    %10 = vsyncpa [#allocation6], 0
    %11 = vsyncpa [#allocation9], 0
    %12 = vsyncpa [#allocation4], 0
    // Predicated region
    $region2: #{tpu_custom_call.1} parent=1 // pred_check
      _
    $region3: #{tpu_custom_call.1} parent=1 // pred_check_branch
      %14 = sbr.rel (0) target = $region5
    $region4: #{tpu_custom_call.1} parent=1 // pred_region
      %s15 = sadd.s32 0, 0
      %p16 = scmp.lt.s32.totalorder %s15, 0
      %s17 = scalar_select %p16, %s15, 0
      %s18 = smul.u32 4, %s17
      %s19 = ssub.s32 2, %s18
      %s20 = smul.u32 8, %s19
      %s21 = ssub.s32 32, %s20
      %s22 = sshll.u32 %s21, 4
      %23 = vsyncadd [#allocation3], %s22
      %p24 = scmp.ne.s32.totalorder 0, %s20
      %s25 = smul.addr %s18, 8
      %s26 = scalar_lea.hbm %s0, %s25
      %s27 = smul.u32 8, %s19
      %s28 = sshll.u32 %s26, 4
      %s29 = int_to_ptr.hbm [resolvable:$true] %s28
      %s30 = sshll.u32 [#allocation2], 4
      %s31 = int_to_ptr.vmem [resolvable:$true] %s30
      %s32 = sshll.u32 %s27, 4
      %36 = dma.hbm_to_vmem [thread:$0]  (%p24), %s29, %s32, %s31, [#allocation3], 128, 128, 8
    $region5: #{tpu_custom_call.1} parent=1 // pred_fallthru
      _
    // Predicated region
    $region6: #{tpu_custom_call.1} parent=1 // pred_check
      _
    $region7: #{tpu_custom_call.1} parent=1 // pred_check_branch
      %38 = sbr.rel (0) target = $region9
    $region8: #{tpu_custom_call.1} parent=1 // pred_region
      %s39 = sadd.s32 0, 0
      %p40 = scmp.lt.s32.totalorder %s39, 0
      %s41 = scalar_select %p40, %s39, 0
      %s42 = smul.u32 4, %s41
      %s43 = ssub.s32 2, %s42
      %s44 = smul.u32 8, %s43
      %s45 = ssub.s32 32, %s44
      %s46 = sshll.u32 %s45, 4
      %47 = vsyncadd [#allocation6], %s46
      %p48 = scmp.ne.s32.totalorder 0, %s44
      %s49 = smul.addr %s42, 8
      %s50 = scalar_lea.hbm %s1, %s49
      %s51 = smul.u32 8, %s43
      %s52 = sshll.u32 %s50, 4
      %s53 = int_to_ptr.hbm [resolvable:$true] %s52
      %s54 = sshll.u32 [#allocation5], 4
      %s55 = int_to_ptr.vmem [resolvable:$true] %s54
      %s56 = sshll.u32 %s51, 4
      %60 = dma.hbm_to_vmem [thread:$0]  (%p48), %s53, %s56, %s55, [#allocation6], 128, 128, 8
    $region9: #{tpu_custom_call.1} parent=1 // pred_fallthru
      _
    // Predicated region
    $region10: #{tpu_custom_call.1} parent=1 // pred_check
      _
    $region11: #{tpu_custom_call.1} parent=1 // pred_check_branch
      %62 = sbr.rel (0) target = $region13
    $region12: #{tpu_custom_call.1} parent=1 // pred_region
      %s63 = sadd.s32 0, 0
      %p64 = scmp.lt.s32.totalorder %s63, 0
      %s65 = scalar_select %p64, %s63, 0
      %s66 = smul.u32 4, %s65
      %s67 = ssub.s32 2, %s66
      %s68 = smul.u32 8, %s67
      %s69 = ssub.s32 32, %s68
      %s70 = sshll.u32 %s69, 4
      %71 = vsyncadd [#allocation6], %s70
      %p72 = scmp.ne.s32.totalorder 0, %s68
      %s73 = smul.addr %s66, 8
      %s74 = scalar_lea.hbm %s2, %s73
      %s75 = smul.u32 8, %s67
      %s76 = sshll.u32 %s74, 4
      %s77 = int_to_ptr.hbm [resolvable:$true] %s76
      %s78 = sshll.u32 [#allocation7], 4
      %s79 = int_to_ptr.vmem [resolvable:$true] %s78
      %s80 = sshll.u32 %s75, 4
      %84 = dma.hbm_to_vmem [thread:$0]  (%p72), %s77, %s80, %s79, [#allocation6], 128, 128, 8
    $region13: #{tpu_custom_call.1} parent=1 // pred_fallthru
      _
    // Predicated region
    $region14: #{tpu_custom_call.1} parent=1 // pred_check
      _
    $region15: #{tpu_custom_call.1} parent=1 // pred_check_branch
      %86 = sbr.rel (0) target = $region17
    $region16: #{tpu_custom_call.1} parent=1 // pred_region
      %s87 = sadd.s32 0, 0
      %p88 = scmp.lt.s32.totalorder %s87, 0
      %s89 = scalar_select %p88, %s87, 0
      %s90 = smul.u32 4, %s89
      %s91 = ssub.s32 2, %s90
      %s92 = smul.u32 8, %s91
      %s93 = ssub.s32 32, %s92
      %s94 = sshll.u32 %s93, 4
      %95 = vsyncadd [#allocation9], %s94
      %p96 = scmp.ne.s32.totalorder 0, %s92
      %s97 = smul.addr %s90, 8
      %s98 = scalar_lea.hbm %s3, %s97
      %s99 = smul.u32 8, %s91
      %s100 = sshll.u32 %s98, 4
      %s101 = int_to_ptr.hbm [resolvable:$true] %s100
      %s102 = sshll.u32 [#allocation8], 4
      %s103 = int_to_ptr.vmem [resolvable:$true] %s102
      %s104 = sshll.u32 %s99, 4
      %108 = dma.hbm_to_vmem [thread:$0]  (%p96), %s101, %s104, %s103, [#allocation9], 128, 128, 8
    $region17: #{tpu_custom_call.1} parent=1 // pred_fallthru
      _
    // Predicated region
    $region18: #{tpu_custom_call.1} parent=1 // pred_check
      _
    $region19: #{tpu_custom_call.1} parent=1 // pred_check_branch
      %110 = sbr.rel (0) target = $region21
    $region20: #{tpu_custom_call.1} parent=1 // pred_region
      %112 = dma.done [#allocation3], 512
    $region21: #{tpu_custom_call.1} parent=1 // pred_fallthru
      _
    // Predicated region
    $region22: #{tpu_custom_call.1} parent=1 // pred_check
      _
    $region23: #{tpu_custom_call.1} parent=1 // pred_check_branch
      %114 = sbr.rel (0) target = $region25
    $region24: #{tpu_custom_call.1} parent=1 // pred_region
      %116 = dma.done [#allocation6], 512
    $region25: #{tpu_custom_call.1} parent=1 // pred_fallthru
      _
    // Predicated region
    $region26: #{tpu_custom_call.1} parent=1 // pred_check
      _
    $region27: #{tpu_custom_call.1} parent=1 // pred_check_branch
      %118 = sbr.rel (0) target = $region29
    $region28: #{tpu_custom_call.1} parent=1 // pred_region
      %120 = dma.done [#allocation6], 512
    $region29: #{tpu_custom_call.1} parent=1 // pred_fallthru
      _
    // Predicated region
    $region30: #{tpu_custom_call.1} parent=1 // pred_check
      _
    $region31: #{tpu_custom_call.1} parent=1 // pred_check_branch
      %122 = sbr.rel (0) target = $region33
    $region32: #{tpu_custom_call.1} parent=1 // pred_region
      %124 = dma.done [#allocation9], 512
    $region33: #{tpu_custom_call.1} parent=1 // pred_fallthru
      _
    %s125 = sadd.s32 0, 0
    %p126 = scmp.lt.s32.totalorder %s125, 0
    %s127 = scalar_select %p126, %s125, 0
    %s128 = smul.u32 4, %s127
    %s129 = ssub.s32 2, %s128
    %s130 = smul.u32 8, %s129
    %s131 = sadd.s32 0, 0
    %p132 = scmp.lt.s32.totalorder %s131, 0
    %s133 = scalar_select %p132, %s131, 0
    %s134 = smul.u32 4, %s133
    %s135 = ssub.s32 2, %s134
    %s136 = smul.u32 8, %s135
    %s137 = sadd.s32 0, 0
    %p138 = scmp.lt.s32.totalorder %s137, 0
    %s139 = scalar_select %p138, %s137, 0
    %s140 = smul.u32 4, %s139
    %s141 = ssub.s32 2, %s140
    %s142 = smul.u32 8, %s141
    %s143 = sadd.s32 0, 0
    %p144 = scmp.lt.s32.totalorder %s143, 0
    %s145 = scalar_select %p144, %s143, 0
    %s146 = smul.u32 4, %s145
    %s147 = ssub.s32 2, %s146
    %s148 = smul.u32 8, %s147
    %p149 = scmp.eq.s32.totalorder 0, 0
    // Predicated region
    $region34: #{tpu_custom_call.1} parent=1 // pred_check
      %p150 = pneg %p149
    $region35: #{tpu_custom_call.1} parent=1 // pred_check_branch
      %152 = sbr.rel (%p150) target = $region37
    $region36: #{tpu_custom_call.1} parent=1 // pred_region
      %153 = vst [vmem:[#allocation10] sm:$0xff] 0.0
      %154 = vst [vmem:[#allocation10 + $0x8] sm:$0xff] 0.0
      %155 = vst [vmem:[#allocation10 + $0x10] sm:$0xff] 0.0
      %156 = vst [vmem:[#allocation10 + $0x18] sm:$0xff] 0.0
    $region37: #{tpu_custom_call.1} parent=1 // pred_fallthru
      _
    %s157 = sadd.s32 0, 0
    %p158 = scmp.lt.s32.totalorder %s157, 0
    // Predicated region
    $region38: #{tpu_custom_call.1} parent=1 // pred_check
      %p159 = pneg %p158
    $region39: #{tpu_custom_call.1} parent=1 // pred_check_branch
      %161 = sbr.rel (%p159) target = $region41
    $region40: #{tpu_custom_call.1} parent=1 // pred_region
      %v162 = vld [vmem:[#allocation2] sm:$0xff]
      %v163 = vld [vmem:[#allocation2 + $0x8] sm:$0xff]
      %v164 = vld [vmem:[#allocation2 + $0x10] sm:$0xff]
      %v165 = vld [vmem:[#allocation2 + $0x18] sm:$0xff]
      %v166 = vld [vmem:[#allocation5] sm:$0xff]
      %v167 = vld [vmem:[#allocation5 + $0x8] sm:$0xff]
      %v168 = vld [vmem:[#allocation5 + $0x10] sm:$0xff]
      %v169 = vld [vmem:[#allocation5 + $0x18] sm:$0xff]
      %v170 = vsub.f32 %v162, %v166
      %v171 = vsub.f32 %v163, %v167
      %v172 = vsub.f32 %v164, %v168
      %v173 = vsub.f32 %v165, %v169
      %v174 = vand.u32 2147483647, %v170
      %v175 = vand.u32 2147483647, %v171
      %v176 = vand.u32 2147483647, %v172
      %v177 = vand.u32 2147483647, %v173
      %v178 = vld [vmem:[#allocation7] sm:$0xff]
      %v179 = vld [vmem:[#allocation7 + $0x8] sm:$0xff]
      %v180 = vld [vmem:[#allocation7 + $0x10] sm:$0xff]
      %v181 = vld [vmem:[#allocation7 + $0x18] sm:$0xff]
      %v182 = vld [vmem:[#allocation8] sm:$0xff]
      %v183 = vld [vmem:[#allocation8 + $0x8] sm:$0xff]
      %v184 = vld [vmem:[#allocation8 + $0x10] sm:$0xff]
      %v185 = vld [vmem:[#allocation8 + $0x18] sm:$0xff]
      %v186 = vsub.f32 %v178, %v182
      %v187 = vsub.f32 %v179, %v183
      %v188 = vsub.f32 %v180, %v184
      %v189 = vsub.f32 %v181, %v185
      %v190 = vand.u32 2147483647, %v186
      %v191 = vand.u32 2147483647, %v187
      %v192 = vand.u32 2147483647, %v188
      %v193 = vand.u32 2147483647, %v189
      %v194 = vadd.f32 %v174, %v190
      %v195 = vadd.f32 %v175, %v191
      %v196 = vadd.f32 %v176, %v192
      %v197 = vadd.f32 %v177, %v193
      %v198 = vadd.f32 %v194, 0.0
      %v199 = vadd.f32 %v195, 0.0
      %v200 = vadd.f32 %v196, 0.0
      %v201 = vadd.f32 %v197, 0.0
      %v202 = vld [vmem:[#allocation10] sm:$0xff]
      %v203 = vld [vmem:[#allocation10 + $0x8] sm:$0xff]
      %v204 = vld [vmem:[#allocation10 + $0x10] sm:$0xff]
      %v205 = vld [vmem:[#allocation10 + $0x18] sm:$0xff]
      %v206 = vadd.f32 %v202, %v198
      %v207 = vadd.f32 %v203, %v199
      %v208 = vadd.f32 %v204, %v200
      %v209 = vadd.f32 %v205, %v201
      %210 = vst [vmem:[#allocation10] sm:$0xff] %v206
      %211 = vst [vmem:[#allocation10 + $0x8] sm:$0xff] %v207
      %212 = vst [vmem:[#allocation10 + $0x10] sm:$0xff] %v208
      %213 = vst [vmem:[#allocation10 + $0x18] sm:$0xff] %v209
    $region41: #{tpu_custom_call.1} parent=1 // pred_fallthru
      _
    %p214 = scmp.ge.s32.totalorder %s157, 0
    // Predicated region
    $region42: #{tpu_custom_call.1} parent=1 // pred_check
      %p215 = pneg %p214
    $region43: #{tpu_custom_call.1} parent=1 // pred_check_branch
      %217 = sbr.rel (%p215) target = $region45
    $region44: #{tpu_custom_call.1} parent=1 // pred_region
      %v218 = vld [vmem:[#allocation2] sm:$0xff]
      %v219 = vld [vmem:[#allocation2 + $0x8] sm:$0xff]
      %v220 = vld [vmem:[#allocation2 + $0x10] sm:$0xff]
      %v221 = vld [vmem:[#allocation2 + $0x18] sm:$0xff]
      %v222 = vld [vmem:[#allocation5] sm:$0xff]
      %v223 = vld [vmem:[#allocation5 + $0x8] sm:$0xff]
      %v224 = vld [vmem:[#allocation5 + $0x10] sm:$0xff]
      %v225 = vld [vmem:[#allocation5 + $0x18] sm:$0xff]
      %v226 = vsub.f32 %v218, %v222
      %v227 = vsub.f32 %v219, %v223
      %v228 = vsub.f32 %v220, %v224
      %v229 = vsub.f32 %v221, %v225
      %v230 = vand.u32 2147483647, %v226
      %v231 = vand.u32 2147483647, %v227
      %v232 = vand.u32 2147483647, %v228
      %v233 = vand.u32 2147483647, %v229
      %v234 = vld [vmem:[#allocation7] sm:$0xff]
      %v235 = vld [vmem:[#allocation7 + $0x8] sm:$0xff]
      %v236 = vld [vmem:[#allocation7 + $0x10] sm:$0xff]
      %v237 = vld [vmem:[#allocation7 + $0x18] sm:$0xff]
      %v238 = vld [vmem:[#allocation8] sm:$0xff]
      %v239 = vld [vmem:[#allocation8 + $0x8] sm:$0xff]
      %v240 = vld [vmem:[#allocation8 + $0x10] sm:$0xff]
      %v241 = vld [vmem:[#allocation8 + $0x18] sm:$0xff]
      %v242 = vsub.f32 %v234, %v238
      %v243 = vsub.f32 %v235, %v239
      %v244 = vsub.f32 %v236, %v240
      %v245 = vsub.f32 %v237, %v241
      %v246 = vand.u32 2147483647, %v242
      %v247 = vand.u32 2147483647, %v243
      %v248 = vand.u32 2147483647, %v244
      %v249 = vand.u32 2147483647, %v245
      %v250 = vadd.f32 %v230, %v246
      %v251 = vadd.f32 %v231, %v247
      %v252 = vadd.f32 %v232, %v248
      %v253 = vadd.f32 %v233, %v249
      %s254 = smul.u32 %s157, 32
      %v255 = vlaneseq
      %v256 = vshrl.u32 %v255, 7
      %v257 = vadd.s32 %v256, 8
      %v258 = vadd.s32 %v256, 16
      %v259 = vadd.s32 %v256, 24
      %v260 = vstv %s254
      %v261 = vadd.s32 %v260, %v256
      %v262 = vadd.s32 %v260, %v257
      %v263 = vadd.s32 %v260, %v258
      %v264 = vadd.s32 %v260, %v259
      %vm265 = vcmp.lt.s32.totalorder %v261, 16
      %vm266 = vcmp.lt.s32.totalorder %v262, 16
      %vm267 = vcmp.lt.s32.totalorder %v263, 16
      %vm268 = vcmp.lt.s32.totalorder %v264, 16
      %v269 = vsel %vm265, %v250, 0.0
      %v270 = vsel %vm266, %v251, 0.0
      %v271 = vsel %vm267, %v252, 0.0
      %v272 = vsel %vm268, %v253, 0.0
      %v273 = vadd.f32 %v269, 0.0
      %v274 = vadd.f32 %v270, 0.0
      %v275 = vadd.f32 %v271, 0.0
      %v276 = vadd.f32 %v272, 0.0
      %v277 = vld [vmem:[#allocation10] sm:$0xff]
      %v278 = vld [vmem:[#allocation10 + $0x8] sm:$0xff]
      %v279 = vld [vmem:[#allocation10 + $0x10] sm:$0xff]
      %v280 = vld [vmem:[#allocation10 + $0x18] sm:$0xff]
      %v281 = vadd.f32 %v277, %v273
      %v282 = vadd.f32 %v278, %v274
      %v283 = vadd.f32 %v279, %v275
      %v284 = vadd.f32 %v280, %v276
      %285 = vst [vmem:[#allocation10] sm:$0xff] %v281
      %286 = vst [vmem:[#allocation10 + $0x8] sm:$0xff] %v282
      %287 = vst [vmem:[#allocation10 + $0x10] sm:$0xff] %v283
      %288 = vst [vmem:[#allocation10 + $0x18] sm:$0xff] %v284
    $region45: #{tpu_custom_call.1} parent=1 // pred_fallthru
      _
    // Predicated region
    $region46: #{tpu_custom_call.1} parent=1 // pred_check
      _
    $region47: #{tpu_custom_call.1} parent=1 // pred_check_branch
      %290 = sbr.rel (0) target = $region49
    $region48: #{tpu_custom_call.1} parent=1 // pred_region
      %292 = vsyncadd [#allocation4], 0
      %s293 = sshll.u32 [#allocation10], 4
      %s294 = int_to_ptr.vmem [resolvable:$true] %s293
      %s295 = sshll.u32 %s4, 4
      %s296 = int_to_ptr.hbm [resolvable:$true] %s295
      %301 = dma.vmem_to_hbm [thread:$0]  %s294, 512, %s296, [#allocation4], 128, 128, 8
    $region49: #{tpu_custom_call.1} parent=1 // pred_fallthru
      _
    // Predicated region
    $region50: #{tpu_custom_call.1} parent=1 // pred_check
      _
    $region51: #{tpu_custom_call.1} parent=1 // pred_check_branch
      %303 = sbr.rel (0) target = $region53
    $region52: #{tpu_custom_call.1} parent=1 // pred_region
      %305 = dma.done [#allocation4], 512
    $region53: #{tpu_custom_call.1} parent=1 // pred_fallthru
      _
    %306 = vsyncpa [#allocation3], 1
    %307 = vsyncpa [#allocation6], 1
    %308 = vsyncpa [#allocation9], 1
    %309 = vsyncpa [#allocation4], 1

</llo_original>
